<compile_context>
chip_gen: v7x
topology: tpu7x:2x2x1
jax: 0.10.0
libtpu: 0.0.40
codegen_flags: <defaults>
</compile_context>

<pallas_src>
import functools

import jax
import jax.numpy as jnp
from jax import lax
from jax.experimental import pallas as pl
from jax.experimental.pallas import tpu as pltpu


# ---------------------------------------------------------------------------
# Pallas kernel: full discriminator loss for the chosen gan_loss mode.
#   x_ref : (4, B) f32 slab, rows = [real0, real1, fake0, fake1]
#   gp_ref: (1, 1) f32 SMEM scalar (only present when with_gp=True, WGANGP)
#   out   : (1, 1) f32 SMEM scalar
# ---------------------------------------------------------------------------
def _loss_kernel(*refs, mode, inv_b, gp_lambda, with_gp):
    if with_gp:
        gp_ref, x_ref, out_ref = refs
    else:
        x_ref, out_ref = refs
        gp_ref = None

    x = x_ref[...].astype(jnp.float32)                       # (4, B)
    row = lax.broadcasted_iota(jnp.int32, x.shape, 0)        # 0..3 per row
    is_real = row < 2                                        # rows 0,1 = real

    if mode == "WGANGP":
        # -mean(r0) - mean(r1) + mean(f0) + mean(f1)
        signed = jnp.where(is_real, -x, x)
        loss = jnp.sum(signed) * inv_b
        if with_gp:
            loss = loss + gp_lambda * gp_ref[0, 0]
    elif mode == "NSGAN":
        # BCE with target 1 for real (-log x) and 0 for fake (-log(1-x)),
        # log clamped to >= -100 exactly like PyTorch's BCELoss.
        p = jnp.where(is_real, x, 1.0 - x)
        loss = jnp.sum(-jnp.maximum(jnp.log(p), -100.0)) * inv_b
    elif mode == "LSGAN":
        d = jnp.where(is_real, x - 1.0, x)
        loss = jnp.sum(d * d) * (0.5 * inv_b)
    elif mode == "hinge":
        h = jnp.where(is_real, 1.0 - x, x + 1.0)
        loss = jnp.sum(jnp.maximum(h, 0.0)) * inv_b
    else:
        raise TypeError("self.gan_loss is not valid")

    out_ref[0, 0] = loss


# ---------------------------------------------------------------------------
# Python wrapper mirroring VolumetricDesignLoss_D.forward
# ---------------------------------------------------------------------------
def volumetric_design_loss_d(
    real_validity_voxel, fake_validity_voxel, *, gan_loss, gp=None, gp_lambda=10.0
):
    r0, r1 = real_validity_voxel
    f0, f1 = fake_validity_voxel

    # Single-sum-then-scale is only valid when all four heads share a batch
    # size (true for this module; PyTorch normalizes each head by its own B).
    B = r0.shape[0]
    assert r1.shape[0] == B and f0.shape[0] == B and f1.shape[0] == B, (
        "all validity heads must share the same batch size"
    )

    # Stack into one lane-dense (4, B) f32 slab: one DMA instead of four.
    x = jnp.concatenate(
        [
            jnp.reshape(r0, (1, B)),
            jnp.reshape(r1, (1, B)),
            jnp.reshape(f0, (1, B)),
            jnp.reshape(f1, (1, B)),
        ],
        axis=0,
    ).astype(jnp.float32)

    with_gp = (gan_loss == "WGANGP") and (gp is not None)

    kernel = functools.partial(
        _loss_kernel,
        mode=gan_loss,
        inv_b=1.0 / float(B),
        gp_lambda=float(gp_lambda),
        with_gp=with_gp,
    )

    in_specs = []
    args = []
    if with_gp:
        in_specs.append(pl.BlockSpec(memory_space=pltpu.MemorySpace.SMEM))
        args.append(jnp.asarray(gp, jnp.float32).reshape(1, 1))
    in_specs.append(pl.BlockSpec(memory_space=pltpu.MemorySpace.VMEM))
    args.append(x)

    out = pl.pallas_call(
        kernel,
        out_shape=jax.ShapeDtypeStruct((1, 1), jnp.float32),
        in_specs=in_specs,
        out_specs=pl.BlockSpec(memory_space=pltpu.MemorySpace.SMEM),
    )(*args)

    return out[0, 0]


# ---------------------------------------------------------------------------
# Pure-JAX reference (matches the PyTorch semantics) for verification.
# ---------------------------------------------------------------------------
def _reference(real, fake, gan_loss, gp=None, gp_lambda=10.0):
    r0, r1 = real
    f0, f1 = fake
    if gan_loss == "WGANGP":
        loss = -jnp.mean(r0) - jnp.mean(r1) + jnp.mean(f0) + jnp.mean(f1)
        return loss + (gp_lambda * gp if gp is not None else 0.0)
    if gan_loss == "NSGAN":
        br = lambda x: jnp.mean(-jnp.maximum(jnp.log(x), -100.0))
        bf = lambda x: jnp.mean(-jnp.maximum(jnp.log(1.0 - x), -100.0))
        return br(r0) + br(r1) + bf(f0) + bf(f1)
    if gan_loss == "LSGAN":
        return 0.5 * (
            jnp.mean((r0 - 1.0) ** 2)
            + jnp.mean((r1 - 1.0) ** 2)
            + jnp.mean(f0 ** 2)
            + jnp.mean(f1 ** 2)
        )
    if gan_loss == "hinge":
        relu = lambda x: jnp.maximum(x, 0.0)
        return (
            jnp.mean(relu(1.0 - r0))
            + jnp.mean(relu(1.0 - r1))
            + jnp.mean(relu(f0 + 1.0))
            + jnp.mean(relu(f1 + 1.0))
        )
    raise TypeError("gan_loss is not valid")


if __name__ == "__main__":
    key = jax.random.PRNGKey(0)
    k0, k1, k2, k3 = jax.random.split(key, 4)

    B = 8  # batch size of each validity head output (shape (B, 1) like PyTorch)

    # Raw discriminator scores (unbounded) — used for WGANGP / LSGAN / hinge.
    real_raw = [
        jax.random.normal(k0, (B, 1), jnp.float32),
        jax.random.normal(k1, (B, 1), jnp.float32),
    ]
    fake_raw = [
        jax.random.normal(k2, (B, 1), jnp.float32),
        jax.random.normal(k3, (B, 1), jnp.float32),
    ]
    # Sigmoid-squashed probabilities — required for NSGAN (BCE expects (0,1)).
    real_prob = [jax.nn.sigmoid(x) for x in real_raw]
    fake_prob = [jax.nn.sigmoid(x) for x in fake_raw]

    gp = jnp.float32(0.37)  # synthetic gradient-penalty scalar
    gp_lambda = 10.0

    cases = [
        ("WGANGP", real_raw, fake_raw, gp),
        ("WGANGP", real_raw, fake_raw, None),
        ("NSGAN", real_prob, fake_prob, None),
        ("LSGAN", real_raw, fake_raw, None),
        ("hinge", real_raw, fake_raw, None),
    ]

    for mode, real, fake, gp_arg in cases:
        out = volumetric_design_loss_d(
            real, fake, gan_loss=mode, gp=gp_arg, gp_lambda=gp_lambda
        )
        out = jax.block_until_ready(out)
        ref = _reference(real, fake, mode, gp=gp_arg, gp_lambda=gp_lambda)
        assert jnp.allclose(out, ref, rtol=1e-5, atol=1e-5), (mode, out, ref)

    print("KERNEL_OK")
</pallas_src>

<mosaic_0001>
module attributes {stable_mosaic.version = 11 : i64} {
  func.func @_loss_kernel(%arg0: memref<1x1xf32, #tpu.memory_space<smem>>, %arg1: memref<4x8xf32, #tpu.memory_space<vmem>>, %arg2: memref<1x1xf32, #tpu.memory_space<smem>>) attributes {dimension_semantics = [], scalar_prefetch = 0 : i64, scratch_operands = 0 : i64, tpu.core_type = #tpu.core_type<tc>} {
    %c0 = arith.constant 0 : index
    %c0_0 = arith.constant 0 : index
    %0 = vector.load %arg1[%c0, %c0_0] : memref<4x8xf32, #tpu.memory_space<vmem>>, vector<4x8xf32>
    %1 = tpu.iota {dimensions = array<i32: 0>} : vector<4x8xi32>
    %c2_i32 = arith.constant 2 : i32
    %2 = vector.broadcast %c2_i32 : i32 to vector<4x8xi32>
    %3 = arith.cmpi slt, %1, %2 : vector<4x8xi32>
    %cst = arith.constant 0.000000e+00 : f32
    %4 = vector.broadcast %cst : f32 to vector<4x8xf32>
    %5 = arith.subf %4, %0 : vector<4x8xf32>
    %6 = arith.select %3, %5, %0 : vector<4x8xi1>, vector<4x8xf32>
    %7 = vector.shape_cast %6 : vector<4x8xf32> to vector<1x4x8xf32>
    %cst_1 = arith.constant dense<0.000000e+00> : vector<1xf32>
    %8 = vector.multi_reduction <add>, %7, %cst_1 [1, 2] : vector<1x4x8xf32> to vector<1xf32>
    %9 = vector.shape_cast %8 : vector<1xf32> to vector<1x1x1xf32>
    %10 = vector.extract %9[0, 0, 0] : f32 from vector<1x1x1xf32>
    %cst_2 = arith.constant 1.250000e-01 : f32
    %11 = arith.mulf %10, %cst_2 : f32
    %c0_3 = arith.constant 0 : index
    %c0_4 = arith.constant 0 : index
    %12 = memref.load %arg0[%c0_3, %c0_4] : memref<1x1xf32, #tpu.memory_space<smem>>
    %cst_5 = arith.constant 1.000000e+01 : f32
    %13 = arith.mulf %cst_5, %12 : f32
    %14 = arith.addf %11, %13 : f32
    %c0_6 = arith.constant 0 : index
    %c0_7 = arith.constant 0 : index
    %15 = memref.load %arg2[%c0_6, %c0_7] : memref<1x1xf32, #tpu.memory_space<smem>>
    memref.store %14, %arg2[%c0_6, %c0_7] : memref<1x1xf32, #tpu.memory_space<smem>>
    return
  }
}

</mosaic_0001>

<llo_original>
// kernel: tpu_custom_call.1
$region0: #{tpu_custom_call.1}
  #allocation0 [shape = 'u32[]', space=smem, size = 0x4, offset = 0x4, fixed_abs, tag = 'smem constant byte address 0x4 - core index']
  #allocation1 [shape = 'u32[144,128]{1,0:T(1,128)}', space=vmem, size = 0x12000, scoped, tag = 'internal scratch']
  #allocation2 [shape = 'f32[1,1]{1,0:T(1,128)S(6)}', space=smem, size = 0x200, scoped, tag = 'scoped memory for tpu_custom_call.1']
  %s0 = inlined_call_operand.<no memory space> [shape: f32[1,1], index: 0, kind: input, shape index: {}]
  %s1 = inlined_call_operand.hbm [shape: f32[4,8], index: 1, kind: input, shape index: {}]
  %s2 = inlined_call_operand.hbm [shape: f32[1,1], index: 2, kind: output, shape index: {}]
  %s3 = sld [smem:[#allocation0]]
  $region22: #{tpu_custom_call.1} parent=0
    _
  %s5 = ssub.s32 1, %s3
  %s6 = scalar_select 0, %s5, %s3
  %7 = sst [smem:[#allocation2]] %s0
  $region1: #{tpu_custom_call.1} parent=0
    #allocation3 [shape = 'u8[2048]{0}', space=vmem, size = 0x800, scoped, tag = 'input window, operand 1, single buffered']
    #allocation4 [shape = 's32[1]{0}', space=sflag, size = 0x4, scoped, tag = 'scoped memory for tpu_custom_call.1']
    #allocation5 [shape = 's32[1]{0}', space=sflag, size = 0x4, scoped, tag = 'scoped memory for tpu_custom_call.1']
    #allocation6 [shape = 'u8[512]{0}', space=smem, size = 0x200, scoped, tag = 'output window, operand 0, single buffered']
    %8 = vsyncpa [#allocation4], 0
    %9 = vsyncpa [#allocation5], 0
    // Predicated region
    $region2: #{tpu_custom_call.1} parent=1 // pred_check
      _
    $region3: #{tpu_custom_call.1} parent=1 // pred_check_branch
      %11 = sbr.rel (0) target = $region5
    $region4: #{tpu_custom_call.1} parent=1 // pred_region
      _
    $region5: #{tpu_custom_call.1} parent=1 // pred_fallthru
      _
    // Predicated region
    $region6: #{tpu_custom_call.1} parent=1 // pred_check
      _
    $region7: #{tpu_custom_call.1} parent=1 // pred_check_branch
      %13 = sbr.rel (0) target = $region9
    $region8: #{tpu_custom_call.1} parent=1 // pred_region
      %s15 = ssub.s32 64, 64
      %16 = vsyncadd [#allocation4], %s15
      %s18 = sshll.u32 [#allocation3], 4
      %s19 = int_to_ptr.vmem [resolvable:$true] %s18
      %21 = dma.hbm_to_vmem [thread:$0]  %s1, 64, %s19, [#allocation4]
    $region9: #{tpu_custom_call.1} parent=1 // pred_fallthru
      _
    // Predicated region
    $region10: #{tpu_custom_call.1} parent=1 // pred_check
      _
    $region11: #{tpu_custom_call.1} parent=1 // pred_check_branch
      %23 = sbr.rel (0) target = $region13
    $region12: #{tpu_custom_call.1} parent=1 // pred_region
      %24 = dma.done [#allocation4], 64
    $region13: #{tpu_custom_call.1} parent=1 // pred_fallthru
      _
    %v25 = vld [vmem:[#allocation3] sm:$0xf]
    %v26 = vlaneseq
    %v27 = vshrl.u32 %v26, 7
    %vm28 = vcmp.lt.s32.totalorder %v27, 2
    %v29 = vsub.f32 0.0, %v25
    %v30 = vsel %vm28, %v29, %v25
    %vm31 = vcmask 60416
    %v32 = vsel %vm31, %v30, 0.0
    %33 = vadd.xlane.f32.xlu0 %v32
    %v34 = vpop.xlane.xlu0 %33
    %v35 = vrot.slane %v34, 4
    %v36 = vadd.f32 %v34, %v35
    %v37 = vrot.slane %v36, 2
    %v38 = vadd.f32 %v36, %v37
    %v39 = vrot.slane %v38, 1
    %v40 = vadd.f32 %v38, %v39
    %s41 = vtos %v40
    %s42 = smul.f32 %s41, 0.125
    %s43 = sld [smem:[#allocation2]]
    %s44 = smul.f32 %s43, 10.0
    %s45 = sadd.f32 %s42, %s44
    %s46 = scalar_lea.smem [#allocation6], 0
    %47 = sst [smem:[%s46]] %s45
    // Predicated region
    $region14: #{tpu_custom_call.1} parent=1 // pred_check
      _
    $region15: #{tpu_custom_call.1} parent=1 // pred_check_branch
      %49 = sbr.rel (0) target = $region17
    $region16: #{tpu_custom_call.1} parent=1 // pred_region
      %s51 = ssub.s32 16, 16
      %52 = vsyncadd [#allocation5], %s51
      %55 = dma.smem_to_hbm [#allocation6], 16, %s2, [#allocation5]
    $region17: #{tpu_custom_call.1} parent=1 // pred_fallthru
      _
    // Predicated region
    $region18: #{tpu_custom_call.1} parent=1 // pred_check
      _
    $region19: #{tpu_custom_call.1} parent=1 // pred_check_branch
      %57 = sbr.rel (0) target = $region21
    $region20: #{tpu_custom_call.1} parent=1 // pred_region
      %58 = dma.done [#allocation5], 16
    $region21: #{tpu_custom_call.1} parent=1 // pred_fallthru
      _
    %59 = sfence
    %60 = vsyncpa [#allocation4], 1
    %61 = vsyncpa [#allocation5], 1

</llo_original>
